<compile_context>
chip_gen: v5e
topology: v5e:2x2
jax: 0.10.0
libtpu: 0.0.40
codegen_flags: <defaults>
</compile_context>

<pallas_src>
import functools

import jax
import jax.numpy as jnp
from jax.experimental import pallas as pl
from jax.experimental.pallas import tpu as pltpu


def _attention_pooling_kernel(x_ref, w1_ref, b1_ref, w2_ref, b2_ref, *rest,
                              has_mask: bool):
    """One grid step = one group of G batch rows.

    x_ref : (G, S, E)   item-embedding history
    w1_ref: (E, Q)      fc1 weight (x @ W layout)
    b1_ref: (1, Q)      fc1 bias
    w2_ref: (1, Q)      fc2 weight (row vector)
    b2_ref: (1, 1)      fc2 bias
    m_ref : (G, S, 1)   optional 0/1 mask (only when has_mask)
    r_ref : (G, 1, E)   pooled output
    """
    if has_mask:
        m_ref, r_ref = rest
    else:
        (r_ref,) = rest
        m_ref = None

    x = x_ref[...]                                   # (G, S, E) f32
    G, S, E = x.shape
    w1 = w1_ref[...]                                 # (E, Q)
    b1 = b1_ref[...]                                 # (1, Q)
    w2 = w2_ref[...]                                 # (1, Q)
    b2 = b2_ref[...]                                 # (1, 1)
    Qd = w1.shape[1]

    # fc1 + tanh as one 2-D MXU matmul over all G*S rows of the group.
    x2 = x.reshape(G * S, E)                         # merge leading dims (lane dim unchanged)
    h = jnp.tanh(jnp.dot(x2, w1, preferred_element_type=jnp.float32) + b1)
    h = h.reshape(G, S, Qd)                          # (G, S, Q)

    # fc2: per-row dot with the (Q,) weight vector -> lane reduction.
    a = jnp.sum(h * w2[None], axis=-1, keepdims=True) + b2[None]   # (G, S, 1)

    if m_ref is not None:
        a = jnp.where(m_ref[...] == 0.0, -1e9, a)

    # Stabilized softmax over the sequence axis (matches F.softmax(dim=-2)).
    a_max = jnp.max(a, axis=1, keepdims=True)        # (G, 1, 1)
    e = jnp.exp(a - a_max)                           # (G, S, 1)
    denom = jnp.sum(e, axis=1, keepdims=True)        # (G, 1, 1)
    alpha = e * pl.reciprocal(denom, approx=False)   # (G, S, 1)

    # r = alpha^T @ x  -> weighted sum over the sequence axis.
    r = jnp.sum(alpha * x, axis=1, keepdims=True)    # (G, 1, E)
    r_ref[...] = r.astype(r_ref.dtype)


def user_encoder_forward(h, w1, b1, w2, b2, mask=None, *, group=8):
    """UserEncoder forward.

    h   : (B, S, E)  item-embedding history
    w1  : (E, Q)     fc1 weight,  b1: (Q,)
    w2  : (Q,)       fc2 weight,  b2: (1,) or scalar
    mask: (B, S)     optional 0/1 mask (0 = ignore position)
    returns (B, E)
    """
    B, S, E = h.shape
    Qd = w1.shape[1]

    G = min(group, max(B, 1))
    B_pad = ((B + G - 1) // G) * G

    x = h.astype(jnp.float32)
    if B_pad != B:
        x = jnp.pad(x, ((0, B_pad - B), (0, 0), (0, 0)))

    w1f = w1.astype(jnp.float32)
    b1f = b1.reshape(1, Qd).astype(jnp.float32)
    w2f = w2.reshape(1, Qd).astype(jnp.float32)
    b2f = jnp.asarray(b2, jnp.float32).reshape(1, 1)

    has_mask = mask is not None
    inputs = [x, w1f, b1f, w2f, b2f]
    in_specs = [
        pl.BlockSpec((G, S, E), lambda i: (i, 0, 0)),
        pl.BlockSpec((E, Qd), lambda i: (0, 0)),
        pl.BlockSpec((1, Qd), lambda i: (0, 0)),
        pl.BlockSpec((1, Qd), lambda i: (0, 0)),
        pl.BlockSpec((1, 1), lambda i: (0, 0)),
    ]
    if has_mask:
        m = mask.astype(jnp.float32).reshape(B, S, 1)
        if B_pad != B:
            m = jnp.pad(m, ((0, B_pad - B), (0, 0), (0, 0)), constant_values=1.0)
        inputs.append(m)
        in_specs.append(pl.BlockSpec((G, S, 1), lambda i: (i, 0, 0)))

    kernel = functools.partial(_attention_pooling_kernel, has_mask=has_mask)

    out = pl.pallas_call(
        kernel,
        out_shape=jax.ShapeDtypeStruct((B_pad, 1, E), h.dtype),
        grid_spec=pltpu.PrefetchScalarGridSpec(
            num_scalar_prefetch=0,
            grid=(B_pad // G,),
            in_specs=in_specs,
            out_specs=pl.BlockSpec((G, 1, E), lambda i: (i, 0, 0)),
        ),
        compiler_params=pltpu.CompilerParams(
            dimension_semantics=("parallel",)),
    )(*inputs)

    # TODO(synk): for production E >= 128 the output is already lane-dense; for
    # small E one could pack groups into the lane dim to avoid masked stores.
    return out[:B, 0, :]


def _reference(h, w1, b1, w2, b2, mask=None):
    """Pure-JAX re-statement of the PyTorch module semantics."""
    a = jnp.tanh(h @ w1 + b1) @ w2.reshape(-1, 1) + b2      # (B, S, 1)
    if mask is not None:
        a = jnp.where(mask[..., None] == 0, -1e9, a)
    alpha = jax.nn.softmax(a, axis=-2)
    r = jnp.squeeze(jnp.swapaxes(alpha, -1, -2) @ h, axis=-2)
    return r


if __name__ == "__main__":
    B, S, E, Qd = 16, 8, 32, 16

    key = jax.random.PRNGKey(0)
    kx, kw1, kb1, kw2, kb2, km = jax.random.split(key, 6)
    h = jax.random.normal(kx, (B, S, E), dtype=jnp.float32)
    w1 = jax.random.normal(kw1, (E, Qd), dtype=jnp.float32) * (1.0 / jnp.sqrt(E))
    b1 = jax.random.normal(kb1, (Qd,), dtype=jnp.float32) * 0.1
    w2 = jax.random.normal(kw2, (Qd,), dtype=jnp.float32) * (1.0 / jnp.sqrt(Qd))
    b2 = jax.random.normal(kb2, (1,), dtype=jnp.float32) * 0.1
    mask = (jax.random.uniform(km, (B, S)) > 0.3).astype(jnp.float32)

    # Masked path.
    u = user_encoder_forward(h, w1, b1, w2, b2, mask)
    u = jax.block_until_ready(u)
    u_ref = _reference(h, w1, b1, w2, b2, mask)
    assert u.shape == (B, E), f"bad output shape {u.shape}"
    assert jnp.allclose(u, u_ref, atol=1e-4, rtol=1e-4), "masked output mismatch"

    # Unmasked path (separate kernel variant, no ones-mask materialized).
    u2 = user_encoder_forward(h, w1, b1, w2, b2, None)
    u2 = jax.block_until_ready(u2)
    u2_ref = _reference(h, w1, b1, w2, b2, None)
    assert jnp.allclose(u2, u2_ref, atol=1e-4, rtol=1e-4), "unmasked output mismatch"

    print("KERNEL_OK")
</pallas_src>

<mosaic_0001>
module attributes {stable_mosaic.version = 11 : i64} {
  func.func @_attention_pooling_kernel(%arg0: i32, %arg1: memref<8x8x32xf32, #tpu.memory_space<vmem>>, %arg2: memref<32x16xf32, #tpu.memory_space<vmem>>, %arg3: memref<1x16xf32, #tpu.memory_space<vmem>>, %arg4: memref<1x16xf32, #tpu.memory_space<vmem>>, %arg5: memref<1x1xf32, #tpu.memory_space<vmem>>, %arg6: memref<8x8x1xf32, #tpu.memory_space<vmem>>, %arg7: memref<8x1x32xf32, #tpu.memory_space<vmem>>) attributes {dimension_semantics = [#tpu.dimension_semantics<parallel>], iteration_bounds = array<i64: 2>, scalar_prefetch = 0 : i64, scratch_operands = 0 : i64, tpu.core_type = #tpu.core_type<tc>, window_params = [{transform_indices = @transform_0, window_bounds = array<i64: 8, 8, 32>}, {pipeline_mode = #tpu.pipeline_mode<synchronous>, transform_indices = @transform_1, window_bounds = array<i64: 32, 16>}, {pipeline_mode = #tpu.pipeline_mode<synchronous>, transform_indices = @transform_2, window_bounds = array<i64: 1, 16>}, {pipeline_mode = #tpu.pipeline_mode<synchronous>, transform_indices = @transform_3, window_bounds = array<i64: 1, 16>}, {pipeline_mode = #tpu.pipeline_mode<synchronous>, transform_indices = @transform_4, window_bounds = array<i64: 1, 1>}, {transform_indices = @transform_5, window_bounds = array<i64: 8, 8, 1>}, {transform_indices = @transform_6, window_bounds = array<i64: 8, 1, 32>}]} {
    %c0 = arith.constant 0 : index
    %c0_0 = arith.constant 0 : index
    %c0_1 = arith.constant 0 : index
    %0 = vector.load %arg1[%c0, %c0_0, %c0_1] : memref<8x8x32xf32, #tpu.memory_space<vmem>>, vector<8x8x32xf32>
    %c0_2 = arith.constant 0 : index
    %c0_3 = arith.constant 0 : index
    %1 = vector.load %arg2[%c0_2, %c0_3] : memref<32x16xf32, #tpu.memory_space<vmem>>, vector<32x16xf32>
    %c0_4 = arith.constant 0 : index
    %c0_5 = arith.constant 0 : index
    %2 = vector.load %arg3[%c0_4, %c0_5] : memref<1x16xf32, #tpu.memory_space<vmem>>, vector<1x16xf32>
    %c0_6 = arith.constant 0 : index
    %c0_7 = arith.constant 0 : index
    %3 = vector.load %arg4[%c0_6, %c0_7] : memref<1x16xf32, #tpu.memory_space<vmem>>, vector<1x16xf32>
    %c0_8 = arith.constant 0 : index
    %c0_9 = arith.constant 0 : index
    %4 = vector.load %arg5[%c0_8, %c0_9] : memref<1x1xf32, #tpu.memory_space<vmem>>, vector<1x1xf32>
    %5 = vector.shape_cast %0 : vector<8x8x32xf32> to vector<64x32xf32>
    %cst = arith.constant dense<0.000000e+00> : vector<64x16xf32>
    %6 = tpu.matmul %5, %1, %cst {dimension_numbers = #tpu.dot_dimension_numbers<[1], [0], [0], [1], [0, 0, 1, 1], [], []>} : vector<64x32xf32>, vector<32x16xf32>, vector<64x16xf32> -> vector<64x16xf32>
    %7 = vector.broadcast %2 : vector<1x16xf32> to vector<64x16xf32>
    %8 = arith.addf %6, %7 : vector<64x16xf32>
    %9 = math.tanh %8 : vector<64x16xf32>
    %10 = vector.shape_cast %9 : vector<64x16xf32> to vector<8x8x16xf32>
    %11 = vector.shape_cast %3 : vector<1x16xf32> to vector<1x1x16xf32>
    %12 = vector.broadcast %11 : vector<1x1x16xf32> to vector<8x8x16xf32>
    %13 = arith.mulf %10, %12 : vector<8x8x16xf32>
    %cst_10 = arith.constant dense<0.000000e+00> : vector<8x8xf32>
    %14 = vector.multi_reduction <add>, %13, %cst_10 [2] : vector<8x8x16xf32> to vector<8x8xf32>
    %15 = vector.shape_cast %14 : vector<8x8xf32> to vector<8x8x1xf32>
    %16 = vector.shape_cast %4 : vector<1x1xf32> to vector<1x1x1xf32>
    %17 = vector.broadcast %16 : vector<1x1x1xf32> to vector<8x8x1xf32>
    %18 = arith.addf %15, %17 : vector<8x8x1xf32>
    %c0_11 = arith.constant 0 : index
    %c0_12 = arith.constant 0 : index
    %c0_13 = arith.constant 0 : index
    %19 = vector.load %arg6[%c0_11, %c0_12, %c0_13] : memref<8x8x1xf32, #tpu.memory_space<vmem>>, vector<8x8x1xf32>
    %cst_14 = arith.constant 0.000000e+00 : f32
    %20 = vector.broadcast %cst_14 : f32 to vector<8x8x1xf32>
    %21 = arith.cmpf oeq, %19, %20 : vector<8x8x1xf32>
    %cst_15 = arith.constant -1.000000e+09 : f32
    %22 = vector.broadcast %cst_15 : f32 to vector<8x8x1xf32>
    %23 = arith.select %21, %22, %18 : vector<8x8x1xi1>, vector<8x8x1xf32>
    %cst_16 = arith.constant dense<0xFF800000> : vector<8x1xf32>
    %24 = vector.multi_reduction <maximumf>, %23, %cst_16 [1] : vector<8x8x1xf32> to vector<8x1xf32>
    %25 = vector.shape_cast %24 : vector<8x1xf32> to vector<8x1x1xf32>
    %26 = vector.broadcast %25 : vector<8x1x1xf32> to vector<8x8x1xf32>
    %27 = arith.subf %23, %26 : vector<8x8x1xf32>
    %28 = math.exp %27 : vector<8x8x1xf32>
    %cst_17 = arith.constant dense<0.000000e+00> : vector<8x1xf32>
    %29 = vector.multi_reduction <add>, %28, %cst_17 [1] : vector<8x8x1xf32> to vector<8x1xf32>
    %30 = vector.shape_cast %29 : vector<8x1xf32> to vector<8x1x1xf32>
    %31 = tpu.reciprocal %30 : vector<8x1x1xf32> -> vector<8x1x1xf32>
    %32 = vector.broadcast %31 : vector<8x1x1xf32> to vector<8x8x1xf32>
    %33 = arith.mulf %28, %32 : vector<8x8x1xf32>
    %34 = vector.broadcast %33 : vector<8x8x1xf32> to vector<8x8x32xf32>
    %35 = arith.mulf %34, %0 : vector<8x8x32xf32>
    %cst_18 = arith.constant dense<0.000000e+00> : vector<8x32xf32>
    %36 = vector.multi_reduction <add>, %35, %cst_18 [1] : vector<8x8x32xf32> to vector<8x32xf32>
    %37 = vector.shape_cast %36 : vector<8x32xf32> to vector<8x1x32xf32>
    %c0_19 = arith.constant 0 : index
    %c0_20 = arith.constant 0 : index
    %c0_21 = arith.constant 0 : index
    %38 = vector.load %arg7[%c0_19, %c0_20, %c0_21] : memref<8x1x32xf32, #tpu.memory_space<vmem>>, vector<8x1x32xf32>
    tpu.vector_store %arg7[%c0_19, %c0_20, %c0_21], %37 {strides = array<i32>} : memref<8x1x32xf32, #tpu.memory_space<vmem>>, vector<8x1x32xf32>,
    return
  }
  func.func @transform_0(%arg0: i32) -> (i32, i32, i32) {
    %c0_i32 = arith.constant 0 : i32
    %c0_i32_0 = arith.constant 0 : i32
    %c0_i32_1 = arith.constant 0 : i32
    return %arg0, %c0_i32, %c0_i32_0 : i32, i32, i32
  }
  func.func @transform_1(%arg0: i32) -> (i32, i32) {
    %c0_i32 = arith.constant 0 : i32
    %c0_i32_0 = arith.constant 0 : i32
    %c0_i32_1 = arith.constant 0 : i32
    return %c0_i32, %c0_i32_0 : i32, i32
  }
  func.func @transform_2(%arg0: i32) -> (i32, i32) {
    %c0_i32 = arith.constant 0 : i32
    %c0_i32_0 = arith.constant 0 : i32
    %c0_i32_1 = arith.constant 0 : i32
    return %c0_i32, %c0_i32_0 : i32, i32
  }
  func.func @transform_3(%arg0: i32) -> (i32, i32) {
    %c0_i32 = arith.constant 0 : i32
    %c0_i32_0 = arith.constant 0 : i32
    %c0_i32_1 = arith.constant 0 : i32
    return %c0_i32, %c0_i32_0 : i32, i32
  }
  func.func @transform_4(%arg0: i32) -> (i32, i32) {
    %c0_i32 = arith.constant 0 : i32
    %c0_i32_0 = arith.constant 0 : i32
    %c0_i32_1 = arith.constant 0 : i32
    return %c0_i32, %c0_i32_0 : i32, i32
  }
  func.func @transform_5(%arg0: i32) -> (i32, i32, i32) {
    %c0_i32 = arith.constant 0 : i32
    %c0_i32_0 = arith.constant 0 : i32
    %c0_i32_1 = arith.constant 0 : i32
    return %arg0, %c0_i32, %c0_i32_0 : i32, i32, i32
  }
  func.func @transform_6(%arg0: i32) -> (i32, i32, i32) {
    %c0_i32 = arith.constant 0 : i32
    %c0_i32_0 = arith.constant 0 : i32
    %c0_i32_1 = arith.constant 0 : i32
    return %arg0, %c0_i32, %c0_i32_0 : i32, i32, i32
  }
}

</mosaic_0001>

<llo_original>
// kernel: tpu_custom_call.1
$region0: #{tpu_custom_call.1}
  #allocation0 [shape = 'u32[]', space=smem, size = 0x4, offset = 0x4, fixed_abs, tag = 'smem constant byte address 0x4 - core index']
  #allocation1 [shape = 'u32[72,128]{1,0:T(1,128)}', space=vmem, size = 0x9000, scoped, tag = 'internal scratch']
  #allocation2 [shape = 'f32[1,1]{1,0:T(1,128)S(1)}', space=vmem, size = 0x200, scoped, tag = 'scoped memory for tpu_custom_call.1']
  %s0 = inlined_call_operand.vmem [shape: f32[16,8,32], index: 0, kind: input, shape index: {}]
  %s1 = inlined_call_operand.vmem [shape: f32[32,16], index: 1, kind: input, shape index: {}]
  %s2 = inlined_call_operand.vmem [shape: f32[1,16], index: 2, kind: input, shape index: {}]
  %s3 = inlined_call_operand.vmem [shape: f32[1,16], index: 3, kind: input, shape index: {}]
  %s4 = inlined_call_operand.<no memory space> [shape: f32[1,1], index: 4, kind: input, shape index: {}]
  %s5 = inlined_call_operand.vmem [shape: f32[16,8,1], index: 5, kind: input, shape index: {}]
  %s6 = inlined_call_operand.hbm [shape: f32[16,1,32], index: 6, kind: output, shape index: {}]
  %s7 = sld [smem:[#allocation0]]
  $region57: #{tpu_custom_call.1} parent=0
    _
  %s9 = ssub.s32 1, %s7
  %s10 = scalar_select 0, %s9, %s7
  %v11 = vstv %s4
  %12 = vst [vmem:[#allocation2] sm:$0x1] %v11
  $region1: #{tpu_custom_call.1} parent=0
    #allocation3 [shape = 'u8[8192]{0}', space=vmem, size = 0x2000, scoped, tag = 'output window, operand 0']
    #allocation4 [shape = 's32[2]{0}', space=sflag, size = 0x8, scoped, tag = 'scoped memory for tpu_custom_call.1']
    %13 = vsyncpa [#allocation4], 0
    %s14 = scalar_lea.sflag [#allocation4], 1
    %15 = vsyncpa %s14, 0
    loop: start=0, step=1, limit=4
    $region2: #{tpu_custom_call.1} parent=1 // loop_pre_header
      _
    $region3: #{tpu_custom_call.1} parent=1 // loop_header
      %s17 = sphi 0, %s21
      %p18 = scmp.ge.s32.totalorder %s17, 4
      %s27 = sphi 0, %s29
      %s30 = sphi 0, %s27
      %s31 = sphi 0, %s30
      %s47 = sphi 0, %s31
      %s51 = sphi 0, %s51
      %s53 = sphi 0, %s51
      %s54 = sphi 0, %s53
      %s68 = sphi 0, %s54
      %s72 = sphi 0, %s72
      %s74 = sphi 0, %s72
      %s75 = sphi 0, %s74
      %s89 = sphi 0, %s75
      %s93 = sphi 0, %s93
      %s95 = sphi 0, %s93
      %s96 = sphi 0, %s95
      %s110 = sphi 0, %s96
      %s114 = sphi 0, %s114
      %s116 = sphi 0, %s114
      %s117 = sphi 0, %s116
      %s131 = sphi 0, %s117
      %s137 = sphi 0, %s139
      %s140 = sphi 0, %s137
      %s141 = sphi 0, %s140
      %s157 = sphi 0, %s141
      %s163 = sphi 0, %s165
      %s166 = sphi 0, %s163
      %s167 = sphi 0, %s166
      %s183 = sphi 0, %s167
    $region4: #{tpu_custom_call.1} parent=1 // loop_header_branch
      %20 = sbr.rel (%p18) target = $region8
    $region5: #{tpu_custom_call.1} parent=1 // loop_body
      %s22 = ssub.s32 %s17, 1
      %s23 = ssub.s32 %s17, 2
      %s24 = sadd.s32 %s17, 1
      %s25 = ssub.s32 %s17, %s24
      %p26 = scmp.eq.s32.totalorder %s25, 0
      %s28 = sadd.s32 %s27, 1
      %s29 = scalar_select %p26, %s27, %s28
      %p32 = pneg %p26
      %p33 = scmp.eq.s32.totalorder %s17, 1
      %p34 = por %p32, %p33
      %p35 = scmp.ne.s32.totalorder %s27, %s30
      %p36 = scmp.eq.s32.totalorder %s17, 0
      %p37 = por %p35, %p36
      %p38 = scmp.ne.s32.totalorder %s27, %s30
      %p39 = scmp.eq.s32.totalorder %s22, 1
      %p40 = por %p38, %p39
      %p41 = scmp.ne.s32.totalorder %s30, %s31
      %p42 = scmp.eq.s32.totalorder %s22, 0
      %p43 = por %p41, %p42
      %p44 = scmp.ne.s32.totalorder %s30, %s31
      %p45 = scmp.eq.s32.totalorder %s23, 1
      %p46 = por %p44, %p45
      %p48 = scmp.ne.s32.totalorder %s31, %s47
      %p49 = scmp.eq.s32.totalorder %s23, 0
      %p50 = por %p48, %p49
      %s52 = sadd.s32 %s51, 1
      %p55 = scmp.eq.s32.totalorder %s17, 1
      %p56 = scmp.ne.s32.totalorder %s51, %s53
      %p57 = scmp.eq.s32.totalorder %s17, 0
      %p58 = por %p56, %p57
      %p59 = scmp.ne.s32.totalorder %s51, %s53
      %p60 = scmp.eq.s32.totalorder %s22, 1
      %p61 = por %p59, %p60
      %p62 = scmp.ne.s32.totalorder %s53, %s54
      %p63 = scmp.eq.s32.totalorder %s22, 0
      %p64 = por %p62, %p63
      %p65 = scmp.ne.s32.totalorder %s53, %s54
      %p66 = scmp.eq.s32.totalorder %s23, 1
      %p67 = por %p65, %p66
      %p69 = scmp.ne.s32.totalorder %s54, %s68
      %p70 = scmp.eq.s32.totalorder %s23, 0
      %p71 = por %p69, %p70
      %s73 = sadd.s32 %s72, 1
      %p76 = scmp.eq.s32.totalorder %s17, 1
      %p77 = scmp.ne.s32.totalorder %s72, %s74
      %p78 = scmp.eq.s32.totalorder %s17, 0
      %p79 = por %p77, %p78
      %p80 = scmp.ne.s32.totalorder %s72, %s74
      %p81 = scmp.eq.s32.totalorder %s22, 1
      %p82 = por %p80, %p81
      %p83 = scmp.ne.s32.totalorder %s74, %s75
      %p84 = scmp.eq.s32.totalorder %s22, 0
      %p85 = por %p83, %p84
      %p86 = scmp.ne.s32.totalorder %s74, %s75
      %p87 = scmp.eq.s32.totalorder %s23, 1
      %p88 = por %p86, %p87
      %p90 = scmp.ne.s32.totalorder %s75, %s89
      %p91 = scmp.eq.s32.totalorder %s23, 0
      %p92 = por %p90, %p91
      %s94 = sadd.s32 %s93, 1
      %p97 = scmp.eq.s32.totalorder %s17, 1
      %p98 = scmp.ne.s32.totalorder %s93, %s95
      %p99 = scmp.eq.s32.totalorder %s17, 0
      %p100 = por %p98, %p99
      %p101 = scmp.ne.s32.totalorder %s93, %s95
      %p102 = scmp.eq.s32.totalorder %s22, 1
      %p103 = por %p101, %p102
      %p104 = scmp.ne.s32.totalorder %s95, %s96
      %p105 = scmp.eq.s32.totalorder %s22, 0
      %p106 = por %p104, %p105
      %p107 = scmp.ne.s32.totalorder %s95, %s96
      %p108 = scmp.eq.s32.totalorder %s23, 1
      %p109 = por %p107, %p108
      %p111 = scmp.ne.s32.totalorder %s96, %s110
      %p112 = scmp.eq.s32.totalorder %s23, 0
      %p113 = por %p111, %p112
      %s115 = sadd.s32 %s114, 1
      %p118 = scmp.eq.s32.totalorder %s17, 1
      %p119 = scmp.ne.s32.totalorder %s114, %s116
      %p120 = scmp.eq.s32.totalorder %s17, 0
      %p121 = por %p119, %p120
      %p122 = scmp.ne.s32.totalorder %s114, %s116
      %p123 = scmp.eq.s32.totalorder %s22, 1
      %p124 = por %p122, %p123
      %p125 = scmp.ne.s32.totalorder %s116, %s117
      %p126 = scmp.eq.s32.totalorder %s22, 0
      %p127 = por %p125, %p126
      %p128 = scmp.ne.s32.totalorder %s116, %s117
      %p129 = scmp.eq.s32.totalorder %s23, 1
      %p130 = por %p128, %p129
      %p132 = scmp.ne.s32.totalorder %s117, %s131
      %p133 = scmp.eq.s32.totalorder %s23, 0
      %p134 = por %p132, %p133
      %s135 = ssub.s32 %s17, %s24
      %p136 = scmp.eq.s32.totalorder %s135, 0
      %s138 = sadd.s32 %s137, 1
      %s139 = scalar_select %p136, %s137, %s138
      %p142 = pneg %p136
      %p143 = scmp.eq.s32.totalorder %s17, 1
      %p144 = por %p142, %p143
      %p145 = scmp.ne.s32.totalorder %s137, %s140
      %p146 = scmp.eq.s32.totalorder %s17, 0
      %p147 = por %p145, %p146
      %p148 = scmp.ne.s32.totalorder %s137, %s140
      %p149 = scmp.eq.s32.totalorder %s22, 1
      %p150 = por %p148, %p149
      %p151 = scmp.ne.s32.totalorder %s140, %s141
      %p152 = scmp.eq.s32.totalorder %s22, 0
      %p153 = por %p151, %p152
      %p154 = scmp.ne.s32.totalorder %s140, %s141
      %p155 = scmp.eq.s32.totalorder %s23, 1
      %p156 = por %p154, %p155
      %p158 = scmp.ne.s32.totalorder %s141, %s157
      %p159 = scmp.eq.s32.totalorder %s23, 0
      %p160 = por %p158, %p159
      %s161 = ssub.s32 %s17, %s24
      %p162 = scmp.eq.s32.totalorder %s161, 0
      %s164 = sadd.s32 %s163, 1
      %s165 = scalar_select %p162, %s163, %s164
      %p168 = pneg %p162
      %p169 = scmp.eq.s32.totalorder %s17, 1
      %p170 = por %p168, %p169
      %p171 = scmp.ne.s32.totalorder %s163, %s166
      %p172 = scmp.eq.s32.totalorder %s17, 0
      %p173 = por %p171, %p172
      %p174 = scmp.ne.s32.totalorder %s163, %s166
      %p175 = scmp.eq.s32.totalorder %s22, 1
      %p176 = por %p174, %p175
      %p177 = scmp.ne.s32.totalorder %s166, %s167
      %p178 = scmp.eq.s32.totalorder %s22, 0
      %p179 = por %p177, %p178
      %p180 = scmp.ne.s32.totalorder %s166, %s167
      %p181 = scmp.eq.s32.totalorder %s23, 1
      %p182 = por %p180, %p181
      %p184 = scmp.ne.s32.totalorder %s167, %s183
      %p185 = scmp.eq.s32.totalorder %s23, 0
      %p186 = por %p184, %p185
      %p187 = scmp.le.s32.totalorder 1, %s17
      %p188 = scmp.lt.s32.totalorder %s17, 3
      %p189 = pnand %p187, %p188
      %p190 = pneg %p189
      // Predicated region
      $region9: #{tpu_custom_call.1} parent=5 // pred_check
        _
      $region10: #{tpu_custom_call.1} parent=5 // pred_check_branch
        %192 = sbr.rel (%p189) target = $region12
      $region11: #{tpu_custom_call.1} parent=5 // pred_region
        %s193 = ssub.s32 %s17, 1
        // Predicated region
        $region13: #{tpu_custom_call.1} parent=11 // pred_check
          %p194 = pneg %p64
        $region14: #{tpu_custom_call.1} parent=11 // pred_check_branch
          %196 = sbr.rel (%p194) target = $region16
        $region15: #{tpu_custom_call.1} parent=11 // pred_region
          _
        $region16: #{tpu_custom_call.1} parent=11 // pred_fallthru
          _
        // Predicated region
        $region17: #{tpu_custom_call.1} parent=11 // pred_check
          %p197 = pneg %p85
        $region18: #{tpu_custom_call.1} parent=11 // pred_check_branch
          %199 = sbr.rel (%p197) target = $region20
        $region19: #{tpu_custom_call.1} parent=11 // pred_region
          _
        $region20: #{tpu_custom_call.1} parent=11 // pred_fallthru
          _
        // Predicated region
        $region21: #{tpu_custom_call.1} parent=11 // pred_check
          %p200 = pneg %p106
        $region22: #{tpu_custom_call.1} parent=11 // pred_check_branch
          %202 = sbr.rel (%p200) target = $region24
        $region23: #{tpu_custom_call.1} parent=11 // pred_region
          _
        $region24: #{tpu_custom_call.1} parent=11 // pred_fallthru
          _
        // Predicated region
        $region25: #{tpu_custom_call.1} parent=11 // pred_check
          %p203 = pneg %p127
        $region26: #{tpu_custom_call.1} parent=11 // pred_check_branch
          %205 = sbr.rel (%p203) target = $region28
        $region27: #{tpu_custom_call.1} parent=11 // pred_region
          _
        $region28: #{tpu_custom_call.1} parent=11 // pred_fallthru
          _
      $region12: #{tpu_custom_call.1} parent=5 // pred_fallthru
        _
      %p206 = scmp.lt.s32.totalorder %s17, 2
      // Predicated region
      $region29: #{tpu_custom_call.1} parent=5 // pred_check
        %p207 = pneg %p206
      $region30: #{tpu_custom_call.1} parent=5 // pred_check_branch
        %209 = sbr.rel (%p207) target = $region32
      $region31: #{tpu_custom_call.1} parent=5 // pred_region
        // Predicated region
        $region33: #{tpu_custom_call.1} parent=31 // pred_check
          %p210 = pneg %p37
        $region34: #{tpu_custom_call.1} parent=31 // pred_check_branch
          %212 = sbr.rel (%p210) target = $region36
        $region35: #{tpu_custom_call.1} parent=31 // pred_region
          %s213 = smul.u32 8, %s17
          %p214 = scmp.lt.s32.totalorder %s213, 15
          %s215 = scalar_select %p214, %s213, 15
          %s216 = smul.addr %s215, 8
          %s217 = scalar_lea.vmem %s0, %s216
          %s218 = smul.u32 8, %s17
        $region36: #{tpu_custom_call.1} parent=31 // pred_fallthru
          _
        // Predicated region
        $region37: #{tpu_custom_call.1} parent=31 // pred_check
          %p219 = pneg %p147
        $region38: #{tpu_custom_call.1} parent=31 // pred_check_branch
          %221 = sbr.rel (%p219) target = $region40
        $region39: #{tpu_custom_call.1} parent=31 // pred_region
          %s222 = smul.u32 8, %s17
          %p223 = scmp.lt.s32.totalorder %s222, 15
          %s224 = scalar_select %p223, %s222, 15
          %s225 = smul.addr %s224, 8
          %s226 = scalar_lea.vmem %s5, %s225
          %s227 = smul.u32 8, %s17
        $region40: #{tpu_custom_call.1} parent=31 // pred_fallthru
          _
      $region32: #{tpu_custom_call.1} parent=5 // pred_fallthru
        _
      %p228 = scmp.le.s32.totalorder 1, %s17
      %p229 = scmp.lt.s32.totalorder %s17, 3
      %p230 = pnand %p228, %p229
      %p231 = pneg %p230
      // Predicated region
      $region41: #{tpu_custom_call.1} parent=5 // pred_check
        _
      $region42: #{tpu_custom_call.1} parent=5 // pred_check_branch
        %233 = sbr.rel (%p230) target = $region44
      $region43: #{tpu_custom_call.1} parent=5 // pred_region
        %s234 = ssub.s32 %s17, 1
        %s235 = smul.u32 8, %s22
        %p236 = scmp.lt.s32.totalorder %s235, 15
        %s237 = scalar_select %p236, %s235, 15
        %s238 = smul.addr %s237, 8
        %s239 = scalar_lea.vmem %s0, %s238
        %p240 = pneg %p43
        %p241 = pneg %p40
        %p242 = pneg %p64
        %p243 = pneg %p61
        %p244 = pneg %p85
        %p245 = pneg %p82
        %p246 = pneg %p106
        %p247 = pneg %p103
        %p248 = pneg %p127
        %p249 = pneg %p124
        %s250 = smul.u32 8, %s22
        %p251 = scmp.lt.s32.totalorder %s250, 15
        %s252 = scalar_select %p251, %s250, 15
        %s253 = smul.addr %s252, 8
        %s254 = scalar_lea.vmem %s5, %s253
        %p255 = pneg %p153
        %p256 = pneg %p150
        %p257 = pneg %p179
        %p258 = pneg %p176
        %s259 = sand.u32 %s166, 1
        %s260 = scalar_lea.sflag [#allocation4], %s259
        %s261 = sand.u32 %s166, 1
        %s262 = smul.addr %s261, 8
        %s263 = scalar_lea.vmem [#allocation3], %s262
        %s264 = smul.u32 8, %s22
        %p265 = scmp.lt.s32.totalorder %s264, 15
        %s266 = scalar_select %p265, %s264, 15
        %s267 = smul.addr %s266, 8
        %s268 = scalar_lea.vmem %s0, %s267
        %s269 = smul.u32 8, %s22
        %s270 = smul.u32 8, %s22
        %p271 = scmp.lt.s32.totalorder %s270, 15
        %s272 = scalar_select %p271, %s270, 15
        %s273 = smul.addr %s272, 8
        %s274 = scalar_lea.vmem %s5, %s273
        %s275 = smul.u32 8, %s22
        %s276 = smul.u32 8, %s22
        %v277 = vld [vmem:[%s268] sm:$0xff]
        %v278 = vld [vmem:[%s268 + $0x8] sm:$0xff]
        %v279 = vld [vmem:[%s268 + $0x10] sm:$0xff]
        %v280 = vld [vmem:[%s268 + $0x18] sm:$0xff]
        %v281 = vld [vmem:[%s268 + $0x20] sm:$0xff]
        %v282 = vld [vmem:[%s268 + $0x28] sm:$0xff]
        %v283 = vld [vmem:[%s268 + $0x30] sm:$0xff]
        %v284 = vld [vmem:[%s268 + $0x38] sm:$0xff]
        %v285 = vld [vmem:[%s1] sm:$0xff]
        %v286 = vld [vmem:[%s1 + $0x8] sm:$0xff]
        %v287 = vld [vmem:[%s1 + $0x10] sm:$0xff]
        %v288 = vld [vmem:[%s1 + $0x18] sm:$0xff]
        %v289 = vld [vmem:[%s2] sm:$0x1]
        %v290 = vld [vmem:[%s3] sm:$0x1]
        %v291 = vld [vmem:[#allocation2] sm:$0x1]
        %v293 = vperm.slane %v289, 0
        %vm295 = vcmask 261120
        %v297 = vsel %vm295, %v277, 0
        %v300 = vsel %vm295, %v278, 0
        %v303 = vsel %vm295, %v279, 0
        %v306 = vsel %vm295, %v280, 0
        %v309 = vsel %vm295, %v281, 0
        %v312 = vsel %vm295, %v282, 0
        %v315 = vsel %vm295, %v283, 0
        %v318 = vsel %vm295, %v284, 0
        %320 = vmatpush.msra.mxu0 0.0
        %321 = vmatpush.msra.mxu0 0.0
        %322 = vmatpush.msra.mxu0 0.0
        %323 = vmatpush.msra.mxu0 0.0
        %324 = vmatpush.msra.mxu0 0.0
        %325 = vmatpush.msra.mxu0 0.0
        %326 = vmatpush.msra.mxu0 0.0
        %327 = vmatpush.msra.mxu0 0.0
        %328 = vmatpush.msra.mxu0 0.0
        %329 = vmatpush.msra.mxu0 0.0
        %330 = vmatpush.msra.mxu0 0.0
        %331 = vmatpush.msra.mxu0 0.0
        %332 = vmatpush.msra.mxu0 %v288
        %333 = vmatpush.msra.mxu0 %v287
        %334 = vmatpush.msra.mxu0 %v286
        %335 = vmatpush.msra.mxu0 %v285
        %336 = vmatmul.f32.gmra.mxu0 %v297
        %v337 = vpop.f32.mrf.mxu0
        %v338 = vadd.f32 %v293, %v337
        %339 = vmatmul.f32.gmra.mxu0 %v300
        %v340 = vpop.f32.mrf.mxu0
        %v341 = vadd.f32 %v293, %v340
        %342 = vmatmul.f32.gmra.mxu0 %v303
        %v343 = vpop.f32.mrf.mxu0
        %v344 = vadd.f32 %v293, %v343
        %345 = vmatmul.f32.gmra.mxu0 %v306
        %v346 = vpop.f32.mrf.mxu0
        %v347 = vadd.f32 %v293, %v346
        %348 = vmatmul.f32.gmra.mxu0 %v309
        %v349 = vpop.f32.mrf.mxu0
        %v350 = vadd.f32 %v293, %v349
        %351 = vmatmul.f32.gmra.mxu0 %v312
        %v352 = vpop.f32.mrf.mxu0
        %v353 = vadd.f32 %v293, %v352
        %354 = vmatmul.f32.gmra.mxu0 %v315
        %v355 = vpop.f32.mrf.mxu0
        %v356 = vadd.f32 %v293, %v355
        %357 = vmatmul.f32.gmra.mxu0 %v318
        %v358 = vpop.f32.mrf.mxu0
        %v359 = vadd.f32 %v293, %v358
        %360 = vdwg.mxu0
        %v361 = vtanh.pop %v338
        %v362 = vtanh.pop %v341
        %v363 = vtanh.pop %v344
        %v364 = vtanh.pop %v347
        %v365 = vtanh.pop %v350
        %v366 = vtanh.pop %v353
        %v367 = vtanh.pop %v356
        %v368 = vtanh.pop %v359
        %v370 = vperm.slane %v290, 0
        %v372 = vmul.f32 %v361, %v370
        %v373 = vmul.f32 %v362, %v370
        %v374 = vmul.f32 %v363, %v370
        %v375 = vmul.f32 %v364, %v370
        %v376 = vmul.f32 %v365, %v370
        %v377 = vmul.f32 %v366, %v370
        %v378 = vmul.f32 %v367, %v370
        %v379 = vmul.f32 %v368, %v370
        %vm380 = vcmask 130048
        %v381 = vsel %vm380, %v372, 0.0
        %382 = vadd.xlane.f32.xlu0 %v381
        %v383 = vpop.xlane.xlu0 %382
        %v384 = vsel %vm380, %v373, 0.0
        %385 = vadd.xlane.f32.xlu0 %v384
        %v386 = vpop.xlane.xlu0 %385
        %v387 = vsel %vm380, %v374, 0.0
        %388 = vadd.xlane.f32.xlu0 %v387
        %v389 = vpop.xlane.xlu0 %388
        %v390 = vsel %vm380, %v375, 0.0
        %391 = vadd.xlane.f32.xlu0 %v390
        %v392 = vpop.xlane.xlu0 %391
        %v393 = vsel %vm380, %v376, 0.0
        %394 = vadd.xlane.f32.xlu0 %v393
        %v395 = vpop.xlane.xlu0 %394
        %v396 = vsel %vm380, %v377, 0.0
        %397 = vadd.xlane.f32.xlu0 %v396
        %v398 = vpop.xlane.xlu0 %397
        %v399 = vsel %vm380, %v378, 0.0
        %400 = vadd.xlane.f32.xlu0 %v399
        %v401 = vpop.xlane.xlu0 %400
        %v402 = vsel %vm380, %v379, 0.0
        %403 = vadd.xlane.f32.xlu0 %v402
        %v404 = vpop.xlane.xlu0 %403
        %v406 = vperm.slane %v291, 0
        %v408 = vadd.f32 %v383, %v406
        %v409 = vadd.f32 %v386, %v406
        %v410 = vadd.f32 %v389, %v406
        %v411 = vadd.f32 %v392, %v406
        %v412 = vadd.f32 %v395, %v406
        %v413 = vadd.f32 %v398, %v406
        %v414 = vadd.f32 %v401, %v406
        %v415 = vadd.f32 %v404, %v406
        %v416 = vld [vmem:[%s274] sm:$0xff]
        %v417 = vld [vmem:[%s274 + $0x8] sm:$0xff]
        %v418 = vld [vmem:[%s274 + $0x10] sm:$0xff]
        %v419 = vld [vmem:[%s274 + $0x18] sm:$0xff]
        %v420 = vld [vmem:[%s274 + $0x20] sm:$0xff]
        %v421 = vld [vmem:[%s274 + $0x28] sm:$0xff]
        %v422 = vld [vmem:[%s274 + $0x30] sm:$0xff]
        %v423 = vld [vmem:[%s274 + $0x38] sm:$0xff]
        %vm424 = vcmp.eq.f32.partialorder %v416, 0.0
        %vm425 = vcmp.eq.f32.partialorder %v417, 0.0
        %vm426 = vcmp.eq.f32.partialorder %v418, 0.0
        %vm427 = vcmp.eq.f32.partialorder %v419, 0.0
        %vm428 = vcmp.eq.f32.partialorder %v420, 0.0
        %vm429 = vcmp.eq.f32.partialorder %v421, 0.0
        %vm430 = vcmp.eq.f32.partialorder %v422, 0.0
        %vm431 = vcmp.eq.f32.partialorder %v423, 0.0
        %v432 = vsel %vm424, -1e+09, %v408
        %v433 = vsel %vm425, -1e+09, %v409
        %v434 = vsel %vm426, -1e+09, %v410
        %v435 = vsel %vm427, -1e+09, %v411
        %v436 = vsel %vm428, -1e+09, %v412
        %v437 = vsel %vm429, -1e+09, %v413
        %v438 = vsel %vm430, -1e+09, %v414
        %v439 = vsel %vm431, -1e+09, %v415
        %vm440 = vcmask 7168
        %v441 = vsel %vm440, %v432, -inf
        %v442 = vrot.slane %v441, 4
        %v443 = vmax.f32 %v441, %v442
        %v444 = vrot.slane %v443, 2
        %v445 = vmax.f32 %v443, %v444
        %v446 = vrot.slane %v445, 1
        %v447 = vmax.f32 %v445, %v446
        %v448 = vsel %vm440, %v433, -inf
        %v449 = vrot.slane %v448, 4
        %v450 = vmax.f32 %v448, %v449
        %v451 = vrot.slane %v450, 2
        %v452 = vmax.f32 %v450, %v451
        %v453 = vrot.slane %v452, 1
        %v454 = vmax.f32 %v452, %v453
        %v455 = vsel %vm440, %v434, -inf
        %v456 = vrot.slane %v455, 4
        %v457 = vmax.f32 %v455, %v456
        %v458 = vrot.slane %v457, 2
        %v459 = vmax.f32 %v457, %v458
        %v460 = vrot.slane %v459, 1
        %v461 = vmax.f32 %v459, %v460
        %v462 = vsel %vm440, %v435, -inf
        %v463 = vrot.slane %v462, 4
        %v464 = vmax.f32 %v462, %v463
        %v465 = vrot.slane %v464, 2
        %v466 = vmax.f32 %v464, %v465
        %v467 = vrot.slane %v466, 1
        %v468 = vmax.f32 %v466, %v467
        %v469 = vsel %vm440, %v436, -inf
        %v470 = vrot.slane %v469, 4
        %v471 = vmax.f32 %v469, %v470
        %v472 = vrot.slane %v471, 2
        %v473 = vmax.f32 %v471, %v472
        %v474 = vrot.slane %v473, 1
        %v475 = vmax.f32 %v473, %v474
        %v476 = vsel %vm440, %v437, -inf
        %v477 = vrot.slane %v476, 4
        %v478 = vmax.f32 %v476, %v477
        %v479 = vrot.slane %v478, 2
        %v480 = vmax.f32 %v478, %v479
        %v481 = vrot.slane %v480, 1
        %v482 = vmax.f32 %v480, %v481
        %v483 = vsel %vm440, %v438, -inf
        %v484 = vrot.slane %v483, 4
        %v485 = vmax.f32 %v483, %v484
        %v486 = vrot.slane %v485, 2
        %v487 = vmax.f32 %v485, %v486
        %v488 = vrot.slane %v487, 1
        %v489 = vmax.f32 %v487, %v488
        %v490 = vsel %vm440, %v439, -inf
        %v491 = vrot.slane %v490, 4
        %v492 = vmax.f32 %v490, %v491
        %v493 = vrot.slane %v492, 2
        %v494 = vmax.f32 %v492, %v493
        %v495 = vrot.slane %v494, 1
        %v496 = vmax.f32 %v494, %v495
        %v497 = vsub.f32 %v432, %v447
        %v498 = vsub.f32 %v433, %v454
        %v499 = vsub.f32 %v434, %v461
        %v500 = vsub.f32 %v435, %v468
        %v501 = vsub.f32 %v436, %v475
        %v502 = vsub.f32 %v437, %v482
        %v503 = vsub.f32 %v438, %v489
        %v504 = vsub.f32 %v439, %v496
        %v505 = vmul.f32 %v497, 1.442695
        %v506 = vpow.pop %v505
        %v507 = vmul.f32 %v498, 1.442695
        %v508 = vpow.pop %v507
        %v509 = vmul.f32 %v499, 1.442695
        %v510 = vpow.pop %v509
        %v511 = vmul.f32 %v500, 1.442695
        %v512 = vpow.pop %v511
        %v513 = vmul.f32 %v501, 1.442695
        %v514 = vpow.pop %v513
        %v515 = vmul.f32 %v502, 1.442695
        %v516 = vpow.pop %v515
        %v517 = vmul.f32 %v503, 1.442695
        %v518 = vpow.pop %v517
        %v519 = vmul.f32 %v504, 1.442695
        %v520 = vpow.pop %v519
        %v521 = vsel %vm440, %v506, 0.0
        %v522 = vrot.slane %v521, 4
        %v523 = vadd.f32 %v521, %v522
        %v524 = vrot.slane %v523, 2
        %v525 = vadd.f32 %v523, %v524
        %v526 = vrot.slane %v525, 1
        %v527 = vadd.f32 %v525, %v526
        %v528 = vsel %vm440, %v508, 0.0
        %v529 = vrot.slane %v528, 4
        %v530 = vadd.f32 %v528, %v529
        %v531 = vrot.slane %v530, 2
        %v532 = vadd.f32 %v530, %v531
        %v533 = vrot.slane %v532, 1
        %v534 = vadd.f32 %v532, %v533
        %v535 = vsel %vm440, %v510, 0.0
        %v536 = vrot.slane %v535, 4
        %v537 = vadd.f32 %v535, %v536
        %v538 = vrot.slane %v537, 2
        %v539 = vadd.f32 %v537, %v538
        %v540 = vrot.slane %v539, 1
        %v541 = vadd.f32 %v539, %v540
        %v542 = vsel %vm440, %v512, 0.0
        %v543 = vrot.slane %v542, 4
        %v544 = vadd.f32 %v542, %v543
        %v545 = vrot.slane %v544, 2
        %v546 = vadd.f32 %v544, %v545
        %v547 = vrot.slane %v546, 1
        %v548 = vadd.f32 %v546, %v547
        %v549 = vsel %vm440, %v514, 0.0
        %v550 = vrot.slane %v549, 4
        %v551 = vadd.f32 %v549, %v550
        %v552 = vrot.slane %v551, 2
        %v553 = vadd.f32 %v551, %v552
        %v554 = vrot.slane %v553, 1
        %v555 = vadd.f32 %v553, %v554
        %v556 = vsel %vm440, %v516, 0.0
        %v557 = vrot.slane %v556, 4
        %v558 = vadd.f32 %v556, %v557
        %v559 = vrot.slane %v558, 2
        %v560 = vadd.f32 %v558, %v559
        %v561 = vrot.slane %v560, 1
        %v562 = vadd.f32 %v560, %v561
        %v563 = vsel %vm440, %v518, 0.0
        %v564 = vrot.slane %v563, 4
        %v565 = vadd.f32 %v563, %v564
        %v566 = vrot.slane %v565, 2
        %v567 = vadd.f32 %v565, %v566
        %v568 = vrot.slane %v567, 1
        %v569 = vadd.f32 %v567, %v568
        %v570 = vsel %vm440, %v520, 0.0
        %v571 = vrot.slane %v570, 4
        %v572 = vadd.f32 %v570, %v571
        %v573 = vrot.slane %v572, 2
        %v574 = vadd.f32 %v572, %v573
        %v575 = vrot.slane %v574, 1
        %v576 = vadd.f32 %v574, %v575
        %v577 = vrcp.pop %v527
        %v578 = vmul.f32 %v527, %v577
        %v579 = vsub.f32 1.0, %v578
        %v580 = vmul.f32 %v577, %v579
        %v581 = vadd.f32 %v577, %v580
        %vm582 = vweird.f32 %v527
        %vm583 = vweird.f32 %v577
        %vm584 = vmor %vm582, %vm583
        %v585 = vsel %vm584, %v577, %v581
        %v586 = vand.u32 2147483647, %v527
        %vm587 = vcmp.eq.f32.partialorder %v586, 8.507059e+37
        %v588 = vand.u32 %v527, 2147483648
        %v589 = vor.u32 1.1754944e-38, %v588
        %v590 = vsel %vm587, %v589, %v585
        %v591 = vrcp.pop %v534
        %v592 = vmul.f32 %v534, %v591
        %v593 = vsub.f32 1.0, %v592
        %v594 = vmul.f32 %v591, %v593
        %v595 = vadd.f32 %v591, %v594
        %vm596 = vweird.f32 %v534
        %vm597 = vweird.f32 %v591
        %vm598 = vmor %vm596, %vm597
        %v599 = vsel %vm598, %v591, %v595
        %v600 = vand.u32 2147483647, %v534
        %vm601 = vcmp.eq.f32.partialorder %v600, 8.507059e+37
        %v602 = vand.u32 %v534, 2147483648
        %v603 = vor.u32 1.1754944e-38, %v602
        %v604 = vsel %vm601, %v603, %v599
        %v605 = vrcp.pop %v541
        %v606 = vmul.f32 %v541, %v605
        %v607 = vsub.f32 1.0, %v606
        %v608 = vmul.f32 %v605, %v607
        %v609 = vadd.f32 %v605, %v608
        %vm610 = vweird.f32 %v541
        %vm611 = vweird.f32 %v605
        %vm612 = vmor %vm610, %vm611
        %v613 = vsel %vm612, %v605, %v609
        %v614 = vand.u32 2147483647, %v541
        %vm615 = vcmp.eq.f32.partialorder %v614, 8.507059e+37
        %v616 = vand.u32 %v541, 2147483648
        %v617 = vor.u32 1.1754944e-38, %v616
        %v618 = vsel %vm615, %v617, %v613
        %v619 = vrcp.pop %v548
        %v620 = vmul.f32 %v548, %v619
        %v621 = vsub.f32 1.0, %v620
        %v622 = vmul.f32 %v619, %v621
        %v623 = vadd.f32 %v619, %v622
        %vm624 = vweird.f32 %v548
        %vm625 = vweird.f32 %v619
        %vm626 = vmor %vm624, %vm625
        %v627 = vsel %vm626, %v619, %v623
        %v628 = vand.u32 2147483647, %v548
        %vm629 = vcmp.eq.f32.partialorder %v628, 8.507059e+37
        %v630 = vand.u32 %v548, 2147483648
        %v631 = vor.u32 1.1754944e-38, %v630
        %v632 = vsel %vm629, %v631, %v627
        %v633 = vrcp.pop %v555
        %v634 = vmul.f32 %v555, %v633
        %v635 = vsub.f32 1.0, %v634
        %v636 = vmul.f32 %v633, %v635
        %v637 = vadd.f32 %v633, %v636
        %vm638 = vweird.f32 %v555
        %vm639 = vweird.f32 %v633
        %vm640 = vmor %vm638, %vm639
        %v641 = vsel %vm640, %v633, %v637
        %v642 = vand.u32 2147483647, %v555
        %vm643 = vcmp.eq.f32.partialorder %v642, 8.507059e+37
        %v644 = vand.u32 %v555, 2147483648
        %v645 = vor.u32 1.1754944e-38, %v644
        %v646 = vsel %vm643, %v645, %v641
        %v647 = vrcp.pop %v562
        %v648 = vmul.f32 %v562, %v647
        %v649 = vsub.f32 1.0, %v648
        %v650 = vmul.f32 %v647, %v649
        %v651 = vadd.f32 %v647, %v650
        %vm652 = vweird.f32 %v562
        %vm653 = vweird.f32 %v647
        %vm654 = vmor %vm652, %vm653
        %v655 = vsel %vm654, %v647, %v651
        %v656 = vand.u32 2147483647, %v562
        %vm657 = vcmp.eq.f32.partialorder %v656, 8.507059e+37
        %v658 = vand.u32 %v562, 2147483648
        %v659 = vor.u32 1.1754944e-38, %v658
        %v660 = vsel %vm657, %v659, %v655
        %v661 = vrcp.pop %v569
        %v662 = vmul.f32 %v569, %v661
        %v663 = vsub.f32 1.0, %v662
        %v664 = vmul.f32 %v661, %v663
        %v665 = vadd.f32 %v661, %v664
        %vm666 = vweird.f32 %v569
        %vm667 = vweird.f32 %v661
        %vm668 = vmor %vm666, %vm667
        %v669 = vsel %vm668, %v661, %v665
        %v670 = vand.u32 2147483647, %v569
        %vm671 = vcmp.eq.f32.partialorder %v670, 8.507059e+37
        %v672 = vand.u32 %v569, 2147483648
        %v673 = vor.u32 1.1754944e-38, %v672
        %v674 = vsel %vm671, %v673, %v669
        %v675 = vrcp.pop %v576
        %v676 = vmul.f32 %v576, %v675
        %v677 = vsub.f32 1.0, %v676
        %v678 = vmul.f32 %v675, %v677
        %v679 = vadd.f32 %v675, %v678
        %vm680 = vweird.f32 %v576
        %vm681 = vweird.f32 %v675
        %vm682 = vmor %vm680, %vm681
        %v683 = vsel %vm682, %v675, %v679
        %v684 = vand.u32 2147483647, %v576
        %vm685 = vcmp.eq.f32.partialorder %v684, 8.507059e+37
        %v686 = vand.u32 %v576, 2147483648
        %v687 = vor.u32 1.1754944e-38, %v686
        %v688 = vsel %vm685, %v687, %v683
        %v689 = vmul.f32 %v506, %v590
        %v690 = vmul.f32 %v508, %v604
        %v691 = vmul.f32 %v510, %v618
        %v692 = vmul.f32 %v512, %v632
        %v693 = vmul.f32 %v514, %v646
        %v694 = vmul.f32 %v516, %v660
        %v695 = vmul.f32 %v518, %v674
        %v696 = vmul.f32 %v520, %v688
        %698 = vset.pattern.permute.xlu0 0
        %699 = vperm.xlu0 %698, %v689
        %v700 = vpop.permute.xlu0 %699
        %703 = vset.pattern.permute.xlu0 0
        %704 = vperm.xlu0 %703, %v690
        %v705 = vpop.permute.xlu0 %704
        %708 = vset.pattern.permute.xlu0 0
        %709 = vperm.xlu0 %708, %v691
        %v710 = vpop.permute.xlu0 %709
        %713 = vset.pattern.permute.xlu0 0
        %714 = vperm.xlu0 %713, %v692
        %v715 = vpop.permute.xlu0 %714
        %718 = vset.pattern.permute.xlu0 0
        %719 = vperm.xlu0 %718, %v693
        %v720 = vpop.permute.xlu0 %719
        %723 = vset.pattern.permute.xlu0 0
        %724 = vperm.xlu0 %723, %v694
        %v725 = vpop.permute.xlu0 %724
        %728 = vset.pattern.permute.xlu0 0
        %729 = vperm.xlu0 %728, %v695
        %v730 = vpop.permute.xlu0 %729
        %733 = vset.pattern.permute.xlu0 0
        %734 = vperm.xlu0 %733, %v696
        %v735 = vpop.permute.xlu0 %734
        %v737 = vmul.f32 %v700, %v277
        %v738 = vmul.f32 %v705, %v278
        %v739 = vmul.f32 %v710, %v279
        %v740 = vmul.f32 %v715, %v280
        %v741 = vmul.f32 %v720, %v281
        %v742 = vmul.f32 %v725, %v282
        %v743 = vmul.f32 %v730, %v283
        %v744 = vmul.f32 %v735, %v284
        %v745 = vsel %vm295, %v737, 0.0
        %v746 = vrot.slane %v745, 4
        %v747 = vadd.f32 %v745, %v746
        %v748 = vrot.slane %v747, 2
        %v749 = vadd.f32 %v747, %v748
        %v750 = vrot.slane %v749, 1
        %v751 = vadd.f32 %v749, %v750
        %v752 = vsel %vm295, %v738, 0.0
        %v753 = vrot.slane %v752, 4
        %v754 = vadd.f32 %v752, %v753
        %v755 = vrot.slane %v754, 2
        %v756 = vadd.f32 %v754, %v755
        %v757 = vrot.slane %v756, 1
        %v758 = vadd.f32 %v756, %v757
        %v759 = vsel %vm295, %v739, 0.0
        %v760 = vrot.slane %v759, 4
        %v761 = vadd.f32 %v759, %v760
        %v762 = vrot.slane %v761, 2
        %v763 = vadd.f32 %v761, %v762
        %v764 = vrot.slane %v763, 1
        %v765 = vadd.f32 %v763, %v764
        %v766 = vsel %vm295, %v740, 0.0
        %v767 = vrot.slane %v766, 4
        %v768 = vadd.f32 %v766, %v767
        %v769 = vrot.slane %v768, 2
        %v770 = vadd.f32 %v768, %v769
        %v771 = vrot.slane %v770, 1
        %v772 = vadd.f32 %v770, %v771
        %v773 = vsel %vm295, %v741, 0.0
        %v774 = vrot.slane %v773, 4
        %v775 = vadd.f32 %v773, %v774
        %v776 = vrot.slane %v775, 2
        %v777 = vadd.f32 %v775, %v776
        %v778 = vrot.slane %v777, 1
        %v779 = vadd.f32 %v777, %v778
        %v780 = vsel %vm295, %v742, 0.0
        %v781 = vrot.slane %v780, 4
        %v782 = vadd.f32 %v780, %v781
        %v783 = vrot.slane %v782, 2
        %v784 = vadd.f32 %v782, %v783
        %v785 = vrot.slane %v784, 1
        %v786 = vadd.f32 %v784, %v785
        %v787 = vsel %vm295, %v743, 0.0
        %v788 = vrot.slane %v787, 4
        %v789 = vadd.f32 %v787, %v788
        %v790 = vrot.slane %v789, 2
        %v791 = vadd.f32 %v789, %v790
        %v792 = vrot.slane %v791, 1
        %v793 = vadd.f32 %v791, %v792
        %v794 = vsel %vm295, %v744, 0.0
        %v795 = vrot.slane %v794, 4
        %v796 = vadd.f32 %v794, %v795
        %v797 = vrot.slane %v796, 2
        %v798 = vadd.f32 %v796, %v797
        %v799 = vrot.slane %v798, 1
        %v800 = vadd.f32 %v798, %v799
        %vm801 = vcmask 253952
        %802 = vst.msk [vmem:[%s263] sm:$0x1] %vm801, %v751
        %803 = vst.msk [vmem:[%s263 + $0x1] sm:$0x1] %vm801, %v758
        %804 = vst.msk [vmem:[%s263 + $0x2] sm:$0x1] %vm801, %v765
        %805 = vst.msk [vmem:[%s263 + $0x3] sm:$0x1] %vm801, %v772
        %806 = vst.msk [vmem:[%s263 + $0x4] sm:$0x1] %vm801, %v779
        %807 = vst.msk [vmem:[%s263 + $0x5] sm:$0x1] %vm801, %v786
        %808 = vst.msk [vmem:[%s263 + $0x6] sm:$0x1] %vm801, %v793
        %809 = vst.msk [vmem:[%s263 + $0x7] sm:$0x1] %vm801, %v800
        %s810 = sand.u32 %s166, 1
        %s811 = scalar_lea.sflag [#allocation4], %s810
        %s812 = sand.u32 %s166, 1
        %s813 = smul.addr %s812, 8
        %s814 = scalar_lea.vmem [#allocation3], %s813
        // Predicated region
        $region45: #{tpu_custom_call.1} parent=43 // pred_check
          %p815 = pneg %p176
        $region46: #{tpu_custom_call.1} parent=43 // pred_check_branch
          %817 = sbr.rel (%p815) target = $region48
        $region47: #{tpu_custom_call.1} parent=43 // pred_region
          %s818 = smul.u32 8, %s22
          %820 = vsyncadd %s811, 0
          %s821 = scalar_lea.hbm %s6, %s818
          %s822 = sshll.u32 %s814, 4
          %s823 = int_to_ptr.vmem [resolvable:$true] %s822
          %s824 = sshll.u32 %s821, 4
          %s825 = int_to_ptr.hbm [resolvable:$true] %s824
          %830 = dma.vmem_to_hbm [thread:$0]  %s823, 128, %s825, %s811, 16, 16, 1
        $region48: #{tpu_custom_call.1} parent=43 // pred_fallthru
          _
      $region44: #{tpu_custom_call.1} parent=5 // pred_fallthru
        _
      %p831 = scmp.le.s32.totalorder 2, %s17
      // Predicated region
      $region49: #{tpu_custom_call.1} parent=5 // pred_check
        %p832 = pneg %p831
      $region50: #{tpu_custom_call.1} parent=5 // pred_check_branch
        %834 = sbr.rel (%p832) target = $region52
      $region51: #{tpu_custom_call.1} parent=5 // pred_region
        %s835 = ssub.s32 %s17, 2
        // Predicated region
        $region53: #{tpu_custom_call.1} parent=51 // pred_check
          %p836 = pneg %p182
        $region54: #{tpu_custom_call.1} parent=51 // pred_check_branch
          %838 = sbr.rel (%p836) target = $region56
        $region55: #{tpu_custom_call.1} parent=51 // pred_region
          %s839 = sand.u32 %s167, 1
          %s840 = scalar_lea.sflag [#allocation4], %s839
          %s841 = sand.u32 %s167, 1
          %s842 = smul.addr %s841, 8
          %s843 = scalar_lea.vmem [#allocation3], %s842
          %845 = dma.done %s840, 128
        $region56: #{tpu_custom_call.1} parent=51 // pred_fallthru
          _
      $region52: #{tpu_custom_call.1} parent=5 // pred_fallthru
        _
    $region6: #{tpu_custom_call.1} parent=1 // loop_footer
      %s21 = sadd.s32 1, %s17
    $region7: #{tpu_custom_call.1} parent=1 // loop_footer_branch
      %16 = sbr.rel target = $region3
    $region8: #{tpu_custom_call.1} parent=1 // loop_exit
      _
    %846 = vsyncpa [#allocation4], 1
    %s847 = scalar_lea.sflag [#allocation4], 1
    %848 = vsyncpa %s847, 1

</llo_original>
